<compile_context>
chip_gen: v7x
topology: tpu7x:2x2x1
jax: 0.10.0
libtpu: 0.0.40
codegen_flags: <defaults>
</compile_context>

<pallas_src>
import functools
import math

import numpy as np
import jax
import jax.numpy as jnp
from jax.experimental import pallas as pl
from jax.experimental.pallas import tpu as pltpu


def _round_up(x, m):
    return ((x + m - 1) // m) * m


def _round_down(x, m):
    return (x // m) * m


def _abs_norm_kernel(x_ref, o_ref, *, eps, approx_recip):
    """Generic path: one logical row spans the whole lane axis."""
    x = jnp.maximum(x_ref[...].astype(jnp.float32), 0.0)      # ReLU; |x| == x afterwards
    denom = jnp.maximum(jnp.sum(x, axis=-1, keepdims=True), eps)
    if approx_recip:
        y = x * pl.reciprocal(denom, approx=True)              # EUP slot -> ~free vs VALU
    else:
        y = x / denom                                          # exact divide for f32 parity
    o_ref[...] = y.astype(o_ref.dtype)


def _abs_norm_kernel_packed(x_ref, mask_ref, o_ref, *, eps, approx_recip):
    """Lane-packed small-H path: g rows of length `seg` share one lane-dense super-row.
    Per-row L1 sums via a block-diagonal (W,W) matmul on the otherwise-idle MXU; the
    result is already broadcast across each segment, so no cross-lane relayout."""
    x = jnp.maximum(x_ref[...].astype(jnp.float32), 0.0)
    denom = jnp.maximum(
        jnp.dot(x, mask_ref[...], preferred_element_type=jnp.float32), eps)
    if approx_recip:
        y = x * pl.reciprocal(denom, approx=True)
    else:
        y = x / denom
    o_ref[...] = y.astype(o_ref.dtype)


def _choose_tile_rows(n_rows, lane_width, itemsize,
                      target_block_bytes=2 * 1024 * 1024, min_grid_steps=8):
    """Row tile: dtype-sublane aligned, ~target_block_bytes of input, and small enough
    to keep several grid steps for pipelining / megacore sharding."""
    pack = max(8, 32 // itemsize)          # f32 -> 8, bf16 -> 16, i8/fp8 -> 32
    if n_rows <= pack:
        return n_rows                      # full-extent sublane dim (always legal)
    budget_rows = max(pack, _round_down(target_block_bytes // (lane_width * itemsize), pack))
    cap_rows = max(pack, _round_up(pl.cdiv(n_rows, min_grid_steps), pack))
    return max(pack, min(budget_rows, cap_rows, _round_down(n_rows, pack)))


def abs_normalization(hidden_states, dim=-1, eps=1e-6):
    """Pallas implementation of AbsNormalization(dim, eps)."""
    ndim = hidden_states.ndim
    dim = dim % ndim
    if dim != ndim - 1:
        # Normalized axis must be lane-minor for the kernel; XLA transposes around it.
        x = jnp.moveaxis(hidden_states, dim, -1)
        out = abs_normalization(x, dim=-1, eps=eps)
        return jnp.moveaxis(out, -1, dim)

    orig_shape = hidden_states.shape
    dtype = hidden_states.dtype
    H = orig_shape[-1]
    itemsize = jnp.dtype(dtype).itemsize

    # Flatten leading dims to rows: contiguous reshape -> free (no HBM copy).
    x2d = hidden_states.reshape(-1, H)
    R = x2d.shape[0]

    # Lane-dense packing for small H (sub-32-bit inputs only, so the matmul segment
    # sum is exact after the f32 upcast): fold g = 128/gcd(H,128) rows into one
    # lane-dense super-row (free contiguous reshape).
    seg = H
    packed = False
    if H < 128 and itemsize < 4:
        g = 128 // math.gcd(H, 128)
        if g * H <= 512 and R % g == 0:
            x2d = x2d.reshape(R // g, g * H)
            packed = True
    n_rows, W = x2d.shape

    tile_rows = _choose_tile_rows(n_rows, W, itemsize)
    # Ragged tail handled by Pallas (rows independent; OOB writes dropped).
    grid = (pl.cdiv(n_rows, tile_rows),)

    x_spec = pl.BlockSpec((tile_rows, W), lambda i: (i, 0))
    out_spec = pl.BlockSpec((tile_rows, W), lambda i: (i, 0))

    # Explicit VMEM budget: double-buffered in/out blocks + f32 intermediates (+ mask).
    block_in = tile_rows * W * itemsize
    block_f32 = tile_rows * W * 4
    mask_bytes = 2 * W * W * 4 if packed else 0
    vmem_limit = int(min(40 * 1024 * 1024,
                         max(16 * 1024 * 1024,
                             4 * block_in + 6 * block_f32 + mask_bytes)))

    approx_recip = itemsize < 4

    if packed:
        # Block-diagonal segment-sum mask, built once on host; constant block index
        # keeps it resident in VMEM across all grid steps.
        idx = np.arange(W) // seg
        seg_mask = jnp.asarray((idx[:, None] == idx[None, :]).astype(np.float32))
        kernel = functools.partial(_abs_norm_kernel_packed,
                                   eps=float(eps), approx_recip=approx_recip)
        in_specs = [x_spec, pl.BlockSpec((W, W), lambda i: (0, 0))]
        args = (x2d, seg_mask)
    else:
        kernel = functools.partial(_abs_norm_kernel,
                                   eps=float(eps), approx_recip=approx_recip)
        in_specs = [x_spec]
        args = (x2d,)

    out = pl.pallas_call(
        kernel,
        out_shape=jax.ShapeDtypeStruct((n_rows, W), dtype),
        grid_spec=pltpu.PrefetchScalarGridSpec(
            num_scalar_prefetch=0,
            grid=grid,
            in_specs=in_specs,
            out_specs=out_spec,
        ),
        compiler_params=pltpu.CompilerParams(
            dimension_semantics=("parallel",),
            vmem_limit_bytes=vmem_limit,
        ),
    )(*args)

    return out.reshape(orig_shape)


def _reference(hidden_states, eps=1e-6):
    x = hidden_states.astype(jnp.float32)
    x = jnp.maximum(x, 0.0)
    l1 = jnp.sum(jnp.abs(x), axis=-1, keepdims=True)
    y = x / jnp.maximum(l1, eps)
    return y.astype(hidden_states.dtype)


if __name__ == "__main__":
    key = jax.random.PRNGKey(0)
    k1, k2, k3 = jax.random.split(key, 3)

    # bf16, H divides 128 -> lane-packed (segment-matmul) path.
    x1 = jax.random.normal(k1, (2, 8, 32), dtype=jnp.float32).astype(jnp.bfloat16)
    y1 = jax.block_until_ready(abs_normalization(x1))
    r1 = _reference(x1)
    assert y1.shape == x1.shape and y1.dtype == x1.dtype
    assert jnp.allclose(y1.astype(jnp.float32), r1.astype(jnp.float32),
                        atol=1e-2, rtol=1e-2)

    # f32, non-128-multiple hidden dim, row count not a multiple of the tile:
    # exercises the generic path + ragged-tail handling.
    x2 = jax.random.normal(k2, (3, 7, 160), dtype=jnp.float32)
    y2 = jax.block_until_ready(abs_normalization(x2))
    r2 = _reference(x2)
    assert y2.shape == x2.shape and y2.dtype == x2.dtype
    assert jnp.allclose(y2, r2, atol=1e-5, rtol=1e-5)

    # bf16, H = 48 (does not divide 128) -> generalized gcd packing (W = 384, seg = 48).
    x3 = jax.random.normal(k3, (2, 8, 48), dtype=jnp.float32).astype(jnp.bfloat16)
    y3 = jax.block_until_ready(abs_normalization(x3))
    r3 = _reference(x3)
    assert y3.shape == x3.shape and y3.dtype == x3.dtype
    assert jnp.allclose(y3.astype(jnp.float32), r3.astype(jnp.float32),
                        atol=1e-2, rtol=1e-2)

    print("KERNEL_OK")
</pallas_src>

<mosaic_0001>
module attributes {stable_mosaic.version = 11 : i64} {
  func.func @_abs_norm_kernel_packed(%arg0: i32, %arg1: memref<4x128xbf16, #tpu.memory_space<vmem>>, %arg2: memref<128x128xf32, #tpu.memory_space<vmem>>, %arg3: memref<4x128xbf16, #tpu.memory_space<vmem>>) attributes {dimension_semantics = [#tpu.dimension_semantics<parallel>], iteration_bounds = array<i64: 1>, scalar_prefetch = 0 : i64, scratch_operands = 0 : i64, tpu.core_type = #tpu.core_type<tc>, window_params = [{transform_indices = @transform_0, window_bounds = array<i64: 4, 128>}, {pipeline_mode = #tpu.pipeline_mode<synchronous>, transform_indices = @transform_1, window_bounds = array<i64: 128, 128>}, {transform_indices = @transform_2, window_bounds = array<i64: 4, 128>}]} {
    %c0 = arith.constant 0 : index
    %c0_0 = arith.constant 0 : index
    %0 = vector.load %arg1[%c0, %c0_0] : memref<4x128xbf16, #tpu.memory_space<vmem>>, vector<4x128xbf16>
    %1 = arith.extf %0 : vector<4x128xbf16> to vector<4x128xf32>
    %cst = arith.constant 0.000000e+00 : f32
    %2 = vector.broadcast %cst : f32 to vector<4x128xf32>
    %3 = arith.maximumf %1, %2 : vector<4x128xf32>
    %c0_1 = arith.constant 0 : index
    %c0_2 = arith.constant 0 : index
    %4 = vector.load %arg2[%c0_1, %c0_2] : memref<128x128xf32, #tpu.memory_space<vmem>>, vector<128x128xf32>
    %cst_3 = arith.constant dense<0.000000e+00> : vector<4x128xf32>
    %5 = tpu.matmul %3, %4, %cst_3 {dimension_numbers = #tpu.dot_dimension_numbers<[1], [0], [0], [1], [0, 0, 1, 1], [], []>} : vector<4x128xf32>, vector<128x128xf32>, vector<4x128xf32> -> vector<4x128xf32>
    %cst_4 = arith.constant 9.99999997E-7 : f32
    %6 = vector.broadcast %cst_4 : f32 to vector<4x128xf32>
    %7 = arith.maximumf %5, %6 : vector<4x128xf32>
    %8 = tpu.reciprocal %7 {approx = true} : vector<4x128xf32> -> vector<4x128xf32>
    %9 = arith.mulf %3, %8 : vector<4x128xf32>
    %10 = arith.truncf %9 : vector<4x128xf32> to vector<4x128xbf16>
    %c0_5 = arith.constant 0 : index
    %c0_6 = arith.constant 0 : index
    %11 = vector.load %arg3[%c0_5, %c0_6] : memref<4x128xbf16, #tpu.memory_space<vmem>>, vector<4x128xbf16>
    tpu.vector_store %arg3[%c0_5, %c0_6], %10 {strides = array<i32>} : memref<4x128xbf16, #tpu.memory_space<vmem>>, vector<4x128xbf16>,
    return
  }
  func.func @transform_0(%arg0: i32) -> (i32, i32) {
    %c0_i32 = arith.constant 0 : i32
    %c0_i32_0 = arith.constant 0 : i32
    return %arg0, %c0_i32 : i32, i32
  }
  func.func @transform_1(%arg0: i32) -> (i32, i32) {
    %c0_i32 = arith.constant 0 : i32
    %c0_i32_0 = arith.constant 0 : i32
    %c0_i32_1 = arith.constant 0 : i32
    return %c0_i32, %c0_i32_0 : i32, i32
  }
  func.func @transform_2(%arg0: i32) -> (i32, i32) {
    %c0_i32 = arith.constant 0 : i32
    %c0_i32_0 = arith.constant 0 : i32
    return %arg0, %c0_i32 : i32, i32
  }
}

</mosaic_0001>

<llo_original>
// kernel: tpu_custom_call.1
$region0: #{tpu_custom_call.1}
  #allocation0 [shape = 'u32[]', space=smem, size = 0x4, offset = 0x4, fixed_abs, tag = 'smem constant byte address 0x4 - core index']
  #allocation1 [shape = 'u32[144,128]{1,0:T(1,128)}', space=vmem, size = 0x12000, scoped, tag = 'internal scratch']
  %s0 = inlined_call_operand.hbm [shape: bf16[4,128], index: 0, kind: input, shape index: {}]
  %s1 = inlined_call_operand.hbm [shape: f32[128,128], index: 1, kind: input, shape index: {}]
  %s2 = inlined_call_operand.hbm [shape: bf16[4,128], index: 2, kind: output, shape index: {}]
  %s3 = sld [smem:[#allocation0]]
  $region26: #{tpu_custom_call.1} parent=0
    _
  %s5 = ssub.s32 1, %s3
  %s6 = scalar_select 0, %s5, %s3
  $region1: #{tpu_custom_call.1} parent=0
    #allocation2 [shape = 'u8[1024]{0}', space=vmem, size = 0x400, scoped, tag = 'input window, operand 0, single buffered']
    #allocation3 [shape = 's32[1]{0}', space=sflag, size = 0x4, scoped, tag = 'scoped memory for tpu_custom_call.1']
    #allocation4 [shape = 's32[1]{0}', space=sflag, size = 0x4, scoped, tag = 'scoped memory for tpu_custom_call.1']
    #allocation5 [shape = 'u8[65536]{0}', space=vmem, size = 0x10000, scoped, tag = 'input window, operand 1, single buffered']
    #allocation6 [shape = 's32[1]{0}', space=sflag, size = 0x4, scoped, tag = 'scoped memory for tpu_custom_call.1']
    #allocation7 [shape = 'u8[1024]{0}', space=vmem, size = 0x400, scoped, tag = 'output window, operand 0, single buffered']
    %7 = vsyncpa [#allocation3], 0
    %8 = vsyncpa [#allocation6], 0
    %9 = vsyncpa [#allocation4], 0
    // Predicated region
    $region2: #{tpu_custom_call.1} parent=1 // pred_check
      _
    $region3: #{tpu_custom_call.1} parent=1 // pred_check_branch
      %11 = sbr.rel (0) target = $region5
    $region4: #{tpu_custom_call.1} parent=1 // pred_region
      %s13 = ssub.s32 32, 32
      %14 = vsyncadd [#allocation3], %s13
      %s16 = sshll.u32 [#allocation2], 4
      %s17 = int_to_ptr.vmem [resolvable:$true] %s16
      %19 = dma.hbm_to_vmem [thread:$0]  %s0, 32, %s17, [#allocation3]
    $region5: #{tpu_custom_call.1} parent=1 // pred_fallthru
      _
    // Predicated region
    $region6: #{tpu_custom_call.1} parent=1 // pred_check
      _
    $region7: #{tpu_custom_call.1} parent=1 // pred_check_branch
      %21 = sbr.rel (0) target = $region9
    $region8: #{tpu_custom_call.1} parent=1 // pred_region
      %s23 = ssub.s32 2048, 2048
      %24 = vsyncadd [#allocation6], %s23
      %s25 = sshll.u32 [#allocation5], 4
      %s26 = int_to_ptr.vmem [resolvable:$true] %s25
      %31 = dma.hbm_to_vmem [thread:$0]  %s1, 2048, %s26, [#allocation6], 128, 128, 8
    $region9: #{tpu_custom_call.1} parent=1 // pred_fallthru
      _
    // Predicated region
    $region10: #{tpu_custom_call.1} parent=1 // pred_check
      _
    $region11: #{tpu_custom_call.1} parent=1 // pred_check_branch
      %33 = sbr.rel (0) target = $region13
    $region12: #{tpu_custom_call.1} parent=1 // pred_region
      %34 = dma.done [#allocation3], 32
    $region13: #{tpu_custom_call.1} parent=1 // pred_fallthru
      _
    // Predicated region
    $region14: #{tpu_custom_call.1} parent=1 // pred_check
      _
    $region15: #{tpu_custom_call.1} parent=1 // pred_check_branch
      %36 = sbr.rel (0) target = $region17
    $region16: #{tpu_custom_call.1} parent=1 // pred_region
      %37 = dma.done [#allocation6], 2048
    $region17: #{tpu_custom_call.1} parent=1 // pred_fallthru
      _
    %v38 = vld [vmem:[#allocation2] sm:$0x3]
    %v39 = vunpack.c.l.bf16 %v38
    %v40 = vmax.f32 %v39, 0.0
    %v41 = vld [vmem:[#allocation5] sm:$0xff]
    %v42 = vld [vmem:[#allocation5 + $0x8] sm:$0xff]
    %v43 = vld [vmem:[#allocation5 + $0x10] sm:$0xff]
    %v44 = vld [vmem:[#allocation5 + $0x18] sm:$0xff]
    %v45 = vld [vmem:[#allocation5 + $0x20] sm:$0xff]
    %v46 = vld [vmem:[#allocation5 + $0x28] sm:$0xff]
    %v47 = vld [vmem:[#allocation5 + $0x30] sm:$0xff]
    %v48 = vld [vmem:[#allocation5 + $0x38] sm:$0xff]
    %v49 = vld [vmem:[#allocation5 + $0x40] sm:$0xff]
    %v50 = vld [vmem:[#allocation5 + $0x48] sm:$0xff]
    %v51 = vld [vmem:[#allocation5 + $0x50] sm:$0xff]
    %v52 = vld [vmem:[#allocation5 + $0x58] sm:$0xff]
    %v53 = vld [vmem:[#allocation5 + $0x60] sm:$0xff]
    %v54 = vld [vmem:[#allocation5 + $0x68] sm:$0xff]
    %v55 = vld [vmem:[#allocation5 + $0x70] sm:$0xff]
    %v56 = vld [vmem:[#allocation5 + $0x78] sm:$0xff]
    %57 = vmatprep.subr.mxu0 0.0
    %58 = vmatpush1.msra.mxu0 %v41
    %59 = vmatprep.subr.mxu0 0.0
    %60 = vmatpush1.msra.mxu0 %v42
    %61 = vmatprep.subr.mxu0 0.0
    %62 = vmatpush1.msra.mxu0 %v43
    %63 = vmatprep.subr.mxu0 0.0
    %64 = vmatpush1.msra.mxu0 %v44
    %65 = vmatprep.subr.mxu0 0.0
    %66 = vmatpush1.msra.mxu0 %v45
    %67 = vmatprep.subr.mxu0 0.0
    %68 = vmatpush1.msra.mxu0 %v46
    %69 = vmatprep.subr.mxu0 0.0
    %70 = vmatpush1.msra.mxu0 %v47
    %71 = vmatprep.subr.mxu0 0.0
    %72 = vmatpush1.msra.mxu0 %v48
    %73 = vmatprep.subr.mxu0 0.0
    %74 = vmatpush1.msra.mxu0 %v49
    %75 = vmatprep.subr.mxu0 0.0
    %76 = vmatpush1.msra.mxu0 %v50
    %77 = vmatprep.subr.mxu0 0.0
    %78 = vmatpush1.msra.mxu0 %v51
    %79 = vmatprep.subr.mxu0 0.0
    %80 = vmatpush1.msra.mxu0 %v52
    %81 = vmatprep.subr.mxu0 0.0
    %82 = vmatpush1.msra.mxu0 %v53
    %83 = vmatprep.subr.mxu0 0.0
    %84 = vmatpush1.msra.mxu0 %v54
    %85 = vmatprep.subr.mxu0 0.0
    %86 = vmatpush1.msra.mxu0 %v55
    %87 = vmatprep.subr.mxu0 0.0
    %88 = vmatpush1.msra.mxu0 %v56
    %89 = vmatprep.subr.mxu0 0.0
    %90 = vmatpush1.msra.mxu0 0.0
    %91 = vmatprep.subr.mxu0 0.0
    %92 = vmatpush1.msra.mxu0 0.0
    %93 = vmatprep.subr.mxu0 0.0
    %94 = vmatpush1.msra.mxu0 0.0
    %95 = vmatprep.subr.mxu0 0.0
    %96 = vmatpush1.msra.mxu0 0.0
    %97 = vmatprep.subr.mxu0 0.0
    %98 = vmatpush1.msra.mxu0 0.0
    %99 = vmatprep.subr.mxu0 0.0
    %100 = vmatpush1.msra.mxu0 0.0
    %101 = vmatprep.subr.mxu0 0.0
    %102 = vmatpush1.msra.mxu0 0.0
    %103 = vmatprep.subr.mxu0 0.0
    %104 = vmatpush1.msra.mxu0 0.0
    %105 = vmatprep.subr.mxu0 0.0
    %106 = vmatpush1.msra.mxu0 0.0
    %107 = vmatprep.subr.mxu0 0.0
    %108 = vmatpush1.msra.mxu0 0.0
    %109 = vmatprep.subr.mxu0 0.0
    %110 = vmatpush1.msra.mxu0 0.0
    %111 = vmatprep.subr.mxu0 0.0
    %112 = vmatpush1.msra.mxu0 0.0
    %113 = vmatprep.subr.mxu0 0.0
    %114 = vmatpush1.msra.mxu0 0.0
    %115 = vmatprep.subr.mxu0 0.0
    %116 = vmatpush1.msra.mxu0 0.0
    %117 = vmatprep.subr.mxu0 0.0
    %118 = vmatpush1.msra.mxu0 0.0
    %119 = vmatprep.subr.mxu0 0.0
    %120 = vmatpush1.msra.mxu0 0.0
    %121 = vmatprep.mubr.f32.mxu0 0.0
    %122 = vmatmul.mubr.f32.gmra.mrb[0].mxu0 %v40
    %v123 = vpop.f32.mrb[0].mxu0
    %v124 = vadd.f32 0.0, %v123
    %v125 = vpop.f32.mrb[0].mxu0
    %126 = vdwg.mxu0
    %v127 = vmax.f32 %v124, 1e-06
    %v128 = vrcp.pop %v127
    %v129 = vmul.f32 %v40, %v128
    %v130 = vpack.c.bf16 %v129, %v129
    %131 = vst [vmem:[#allocation7] sm:$0x3] %v130
    // Predicated region
    $region18: #{tpu_custom_call.1} parent=1 // pred_check
      _
    $region19: #{tpu_custom_call.1} parent=1 // pred_check_branch
      %133 = sbr.rel (0) target = $region21
    $region20: #{tpu_custom_call.1} parent=1 // pred_region
      %s135 = ssub.s32 32, 32
      %136 = vsyncadd [#allocation4], %s135
      %s138 = sshll.u32 [#allocation7], 4
      %s139 = int_to_ptr.vmem [resolvable:$true] %s138
      %141 = dma.vmem_to_hbm [thread:$0]  %s139, 32, %s2, [#allocation4]
    $region21: #{tpu_custom_call.1} parent=1 // pred_fallthru
      _
    // Predicated region
    $region22: #{tpu_custom_call.1} parent=1 // pred_check
      _
    $region23: #{tpu_custom_call.1} parent=1 // pred_check_branch
      %143 = sbr.rel (0) target = $region25
    $region24: #{tpu_custom_call.1} parent=1 // pred_region
      %144 = dma.done [#allocation4], 32
    $region25: #{tpu_custom_call.1} parent=1 // pred_fallthru
      _
    %145 = vsyncpa [#allocation3], 1
    %146 = vsyncpa [#allocation6], 1
    %147 = vsyncpa [#allocation4], 1

</llo_original>
